<compile_context>
chip_gen: v7x
topology: tpu7x:2x2x1
jax: 0.10.0
libtpu: 0.0.40
codegen_flags: <defaults>
</compile_context>

<pallas_src>
import functools

import jax
import jax.numpy as jnp
from jax.experimental import pallas as pl
from jax.experimental.pallas import tpu as pltpu

_ALIGN = 16  # sublane multiple that is safe for both f32 (8) and bf16 (16) tiling


def _round_up(n, m):
    return ((n + m - 1) // m) * m


def _num_tensorcores():
    # v7x has 2 TensorCores per chip; v5e/v6e have 1.  Best-effort detection;
    # falls back to 1 (single tile -> lowest per-step overhead on 1-TC chips).
    try:
        kind = (getattr(jax.devices()[0], "device_kind", "") or "").lower()
        if "v7" in kind or "7x" in kind:
            return 2
    except Exception:
        pass
    return 1


def dite_kernel(x_ref, y_ref, w1x_ref, w1y_ref, w2_ref, wd_ref, b_ref, out_ref):
    """One batch tile of the Dite MLP.

    x_ref   : (tb, input_size)    bf16  -- MXU operand
    y_ref   : (tb, 2)             bf16  -- handled on the VPU (K=2 wastes the MXU)
    w1x_ref : (input_size, h_dim) bf16  (resident)
    w1y_ref : (2, h_dim)          f32   (resident)
    w2_ref  : (h_dim, h_dim)      bf16  (resident)
    wd_ref  : (1, h_dim)          f32   (resident; PyTorch dite.weight layout)
    b_ref   : (3, h_dim)          f32   rows: dense1 bias, dense2 bias, [dite bias, 0...]
    """
    y = y_ref[...].astype(jnp.float32)
    b1 = b_ref[0:1, :]          # (1, h_dim)
    b2 = b_ref[1:2, :]          # (1, h_dim)
    bd = b_ref[2:3, 0:1]        # (1, 1)

    # dense1 over the logical concat([x, ypair], dim=1) without materializing it:
    #   [x | ypair] @ [w1x ; w1y] == x @ w1x (MXU) + ypair @ w1y (VPU FMAs).
    h1 = jnp.dot(x_ref[...], w1x_ref[...], preferred_element_type=jnp.float32)
    h1 = h1 + y[:, 0:1] * w1y_ref[0:1, :] + y[:, 1:2] * w1y_ref[1:2, :]
    h1 = jnp.maximum(h1 + b1, 0.0)

    # dense2: bf16 MXU matmul, f32 accumulation + epilogue.
    h2 = jnp.dot(h1.astype(jnp.bfloat16), w2_ref[...],
                 preferred_element_type=jnp.float32)
    h2 = jnp.maximum(h2 + b2, 0.0)

    # dite (N=1): VPU multiply + XLU lane reduction instead of a degenerate
    # [tb, h_dim] x [h_dim, 1] MXU matmul.
    out_ref[...] = jnp.sum(h2 * wd_ref[...], axis=-1, keepdims=True) + bd


def _xavier_normal(key, fan_in, fan_out):
    # Matches nn.init.xavier_normal_ for a Linear(fan_in -> fan_out) layer.
    std = (2.0 / (fan_in + fan_out)) ** 0.5
    return std * jax.random.normal(key, (fan_in, fan_out), dtype=jnp.float32)


def init_dite_params(key, input_size, h_dim):
    in_dim = input_size + 2
    k1, k2, k3 = jax.random.split(key, 3)
    w1 = _xavier_normal(k1, in_dim, h_dim)
    return {
        # dense1 weight split so the kernel never needs the concatenated input.
        "w1x": w1[:input_size, :],                      # (input_size, h_dim)
        "w1y": w1[input_size:, :],                      # (2, h_dim)
        "w2": _xavier_normal(k2, h_dim, h_dim),         # (h_dim, h_dim)
        "wd_row": _xavier_normal(k3, h_dim, 1).T,       # (1, h_dim)
        # rows: dense1 bias, dense2 bias, [dite bias, 0, ...]  (PyTorch inits to 0)
        "bias_pack": jnp.zeros((3, h_dim), jnp.float32),
    }


@functools.partial(jax.jit, static_argnames=("block_batch",))
def dite_forward(params, x, ypair, *, block_batch=4096):
    batch, input_size = x.shape
    h_dim = params["w2"].shape[1]

    # bf16 for the dominant x HBM stream and the MXU operands; small VPU-side
    # weights and the f32 epilogue keep full precision.
    x = x.astype(jnp.bfloat16)
    ypair = ypair.astype(jnp.bfloat16)
    w1x = params["w1x"].astype(jnp.bfloat16)
    w2 = params["w2"].astype(jnp.bfloat16)
    w1y = params["w1y"].astype(jnp.float32)
    wd_row = params["wd_row"].astype(jnp.float32)
    bias_pack = params["bias_pack"].astype(jnp.float32)

    # Batch tile: multiple of _ALIGN, capped at block_batch.  On a 2-TC chip
    # (v7x) size it so the grid has >= 2 steps and dimension_semantics
    # ("parallel",) shards the batch loop across both TensorCores; on v5e/v6e
    # prefer the biggest single tile to minimize per-step overhead.
    ncores = _num_tensorcores()
    bb = max(_ALIGN, (int(block_batch) // _ALIGN) * _ALIGN)
    padded = _round_up(batch, _ALIGN)
    per_core = _round_up(-(-padded // ncores), _ALIGN)
    tb = min(bb, per_core)
    padded = _round_up(padded, tb)
    if padded != batch:
        x = jnp.pad(x, ((0, padded - batch), (0, 0)))
        ypair = jnp.pad(ypair, ((0, padded - batch), (0, 0)))
    grid = (padded // tb,)

    batch_spec = lambda cols: pl.BlockSpec((tb, cols), lambda i: (i, 0))
    resident = lambda shape: pl.BlockSpec(shape, lambda i: (0, 0))

    flops = 2 * padded * (input_size * h_dim + 2 * h_dim + h_dim * h_dim + h_dim)
    bytes_accessed = (
        padded * input_size * 2 + padded * 2 * 2 + padded * 1 * 4       # x, ypair, out
        + input_size * h_dim * 2 + h_dim * h_dim * 2                    # bf16 weights
        + (2 * h_dim + 1 * h_dim + 3 * h_dim) * 4                       # f32 w1y, wd, biases
    )
    cost = pl.CostEstimate(flops=flops, transcendentals=0,
                           bytes_accessed=bytes_accessed)

    out = pl.pallas_call(
        dite_kernel,
        out_shape=jax.ShapeDtypeStruct((padded, 1), jnp.float32),
        grid_spec=pltpu.PrefetchScalarGridSpec(
            num_scalar_prefetch=0,
            grid=grid,
            in_specs=[
                batch_spec(input_size),               # x tile (bf16)
                batch_spec(2),                        # ypair tile (bf16)
                resident((input_size, h_dim)),        # w1x (resident, bf16)
                resident((2, h_dim)),                 # w1y (resident, f32)
                resident((h_dim, h_dim)),             # w2  (resident, bf16)
                resident((1, h_dim)),                 # dite weight row (resident, f32)
                resident((3, h_dim)),                 # packed biases (resident, f32)
            ],
            out_specs=pl.BlockSpec((tb, 1), lambda i: (i, 0)),
        ),
        compiler_params=pltpu.CompilerParams(
            dimension_semantics=("parallel",),        # shard batch loop on v7x megacore
            vmem_limit_bytes=32 * 1024 * 1024,        # safe on v5e/v6e/v7x
        ),
        cost_estimate=cost,
    )(x, ypair, w1x, w1y, w2, wd_row, bias_pack)

    return out[:batch]


def _dite_reference_f32(params, x, ypair):
    # Pure-JAX full-f32 reference of the PyTorch forward.
    w1 = jnp.concatenate([params["w1x"], params["w1y"]], axis=0)
    b1, b2 = params["bias_pack"][0], params["bias_pack"][1]
    bd = params["bias_pack"][2, 0]
    inp = jnp.concatenate([x, ypair], axis=1)
    hp = jax.lax.Precision.HIGHEST
    h1 = jnp.maximum(jnp.dot(inp, w1, precision=hp) + b1, 0.0)
    h2 = jnp.maximum(jnp.dot(h1, params["w2"], precision=hp) + b2, 0.0)
    return jnp.dot(h2, params["wd_row"].T, precision=hp) + bd


def _dite_reference_bf16(params, x, ypair):
    # Reference with the same bf16 matmul-input rounding as the kernel
    # (f32 accumulation and f32 bias/ReLU epilogue).
    b1, b2 = params["bias_pack"][0], params["bias_pack"][1]
    bd = params["bias_pack"][2, 0]
    xb = x.astype(jnp.bfloat16)
    yb = ypair.astype(jnp.bfloat16).astype(jnp.float32)
    h1 = jnp.dot(xb, params["w1x"].astype(jnp.bfloat16),
                 preferred_element_type=jnp.float32)
    h1 = h1 + yb @ params["w1y"]
    h1 = jnp.maximum(h1 + b1, 0.0)
    h2 = jnp.dot(h1.astype(jnp.bfloat16), params["w2"].astype(jnp.bfloat16),
                 preferred_element_type=jnp.float32)
    h2 = jnp.maximum(h2 + b2, 0.0)
    return jnp.sum(h2 * params["wd_row"], axis=-1, keepdims=True) + bd


if __name__ == "__main__":
    input_size = 16
    h_dim = 32
    batch = 24   # small and not a tile multiple -> exercises padding/slicing

    key = jax.random.PRNGKey(0)
    k_params, kx, ky = jax.random.split(key, 3)

    params = init_dite_params(k_params, input_size, h_dim)

    x = jax.random.normal(kx, (batch, input_size), dtype=jnp.float32)
    ypair = jax.random.normal(ky, (batch, 2), dtype=jnp.float32)

    out = dite_forward(params, x, ypair)
    jax.block_until_ready(out)

    assert out.shape == (batch, 1) and out.dtype == jnp.float32

    # Exact check against a reference using the same bf16 matmul rounding.
    ref_bf16 = _dite_reference_bf16(params, x, ypair)
    assert jnp.allclose(out, ref_bf16, rtol=2e-3, atol=2e-3), (out, ref_bf16)

    # Sanity check against the full-f32 PyTorch-semantics reference.
    ref_f32 = _dite_reference_f32(params, x, ypair)
    assert jnp.allclose(out, ref_f32, rtol=5e-2, atol=5e-2), (out, ref_f32)

    print("KERNEL_OK")
</pallas_src>

<mosaic_0001>
module attributes {stable_mosaic.version = 11 : i64} {
  func.func @dite_kernel(%arg0: i32, %arg1: memref<32x16xbf16, #tpu.memory_space<vmem>>, %arg2: memref<32x2xbf16, #tpu.memory_space<vmem>>, %arg3: memref<16x32xbf16, #tpu.memory_space<vmem>>, %arg4: memref<2x32xf32, #tpu.memory_space<vmem>>, %arg5: memref<32x32xbf16, #tpu.memory_space<vmem>>, %arg6: memref<1x32xf32, #tpu.memory_space<vmem>>, %arg7: memref<3x32xf32, #tpu.memory_space<vmem>>, %arg8: memref<32x1xf32, #tpu.memory_space<vmem>>) attributes {dimension_semantics = [#tpu.dimension_semantics<parallel>], iteration_bounds = array<i64: 1>, scalar_prefetch = 0 : i64, scratch_operands = 0 : i64, tpu.core_type = #tpu.core_type<tc>, window_params = [{transform_indices = @transform_0, window_bounds = array<i64: 32, 16>}, {transform_indices = @transform_1, window_bounds = array<i64: 32, 2>}, {pipeline_mode = #tpu.pipeline_mode<synchronous>, transform_indices = @transform_2, window_bounds = array<i64: 16, 32>}, {pipeline_mode = #tpu.pipeline_mode<synchronous>, transform_indices = @transform_3, window_bounds = array<i64: 2, 32>}, {pipeline_mode = #tpu.pipeline_mode<synchronous>, transform_indices = @transform_4, window_bounds = array<i64: 32, 32>}, {pipeline_mode = #tpu.pipeline_mode<synchronous>, transform_indices = @transform_5, window_bounds = array<i64: 1, 32>}, {pipeline_mode = #tpu.pipeline_mode<synchronous>, transform_indices = @transform_6, window_bounds = array<i64: 3, 32>}, {transform_indices = @transform_7, window_bounds = array<i64: 32, 1>}]} {
    %c0 = arith.constant 0 : index
    %c0_0 = arith.constant 0 : index
    %0 = vector.load %arg2[%c0, %c0_0] : memref<32x2xbf16, #tpu.memory_space<vmem>>, vector<32x2xbf16>
    %1 = arith.extf %0 : vector<32x2xbf16> to vector<32x2xf32>
    %c0_1 = arith.constant 0 : index
    %c0_2 = arith.constant 0 : index
    %2 = vector.load %arg7[%c0_1, %c0_2] : memref<3x32xf32, #tpu.memory_space<vmem>>, vector<1x32xf32>
    %c1 = arith.constant 1 : index
    %c0_3 = arith.constant 0 : index
    %3 = vector.load %arg7[%c1, %c0_3] : memref<3x32xf32, #tpu.memory_space<vmem>>, vector<1x32xf32>
    %c2 = arith.constant 2 : index
    %c0_4 = arith.constant 0 : index
    %4 = vector.load %arg7[%c2, %c0_4] : memref<3x32xf32, #tpu.memory_space<vmem>>, vector<1x1xf32>
    %c0_5 = arith.constant 0 : index
    %c0_6 = arith.constant 0 : index
    %5 = vector.load %arg1[%c0_5, %c0_6] : memref<32x16xbf16, #tpu.memory_space<vmem>>, vector<32x16xbf16>
    %c0_7 = arith.constant 0 : index
    %c0_8 = arith.constant 0 : index
    %6 = vector.load %arg3[%c0_7, %c0_8] : memref<16x32xbf16, #tpu.memory_space<vmem>>, vector<16x32xbf16>
    %cst = arith.constant dense<0.000000e+00> : vector<32x32xf32>
    %7 = tpu.matmul %5, %6, %cst {dimension_numbers = #tpu.dot_dimension_numbers<[1], [0], [0], [1], [0, 0, 1, 1], [], []>} : vector<32x16xbf16>, vector<16x32xbf16>, vector<32x32xf32> -> vector<32x32xf32>
    %8 = vector.extract_strided_slice %1 {offsets = [0, 0], sizes = [32, 1], strides = [1, 1]} : vector<32x2xf32> to vector<32x1xf32>
    %c0_9 = arith.constant 0 : index
    %c0_10 = arith.constant 0 : index
    %9 = vector.load %arg4[%c0_9, %c0_10] : memref<2x32xf32, #tpu.memory_space<vmem>>, vector<1x32xf32>
    %10 = vector.broadcast %8 : vector<32x1xf32> to vector<32x32xf32>
    %11 = vector.broadcast %9 : vector<1x32xf32> to vector<32x32xf32>
    %12 = arith.mulf %10, %11 : vector<32x32xf32>
    %13 = arith.addf %7, %12 : vector<32x32xf32>
    %14 = vector.extract_strided_slice %1 {offsets = [0, 1], sizes = [32, 1], strides = [1, 1]} : vector<32x2xf32> to vector<32x1xf32>
    %c1_11 = arith.constant 1 : index
    %c0_12 = arith.constant 0 : index
    %15 = vector.load %arg4[%c1_11, %c0_12] : memref<2x32xf32, #tpu.memory_space<vmem>>, vector<1x32xf32>
    %16 = vector.broadcast %14 : vector<32x1xf32> to vector<32x32xf32>
    %17 = vector.broadcast %15 : vector<1x32xf32> to vector<32x32xf32>
    %18 = arith.mulf %16, %17 : vector<32x32xf32>
    %19 = arith.addf %13, %18 : vector<32x32xf32>
    %20 = vector.broadcast %2 : vector<1x32xf32> to vector<32x32xf32>
    %21 = arith.addf %19, %20 : vector<32x32xf32>
    %cst_13 = arith.constant 0.000000e+00 : f32
    %22 = vector.broadcast %cst_13 : f32 to vector<32x32xf32>
    %23 = arith.maximumf %21, %22 : vector<32x32xf32>
    %24 = arith.truncf %23 : vector<32x32xf32> to vector<32x32xbf16>
    %c0_14 = arith.constant 0 : index
    %c0_15 = arith.constant 0 : index
    %25 = vector.load %arg5[%c0_14, %c0_15] : memref<32x32xbf16, #tpu.memory_space<vmem>>, vector<32x32xbf16>
    %cst_16 = arith.constant dense<0.000000e+00> : vector<32x32xf32>
    %26 = tpu.matmul %24, %25, %cst_16 {dimension_numbers = #tpu.dot_dimension_numbers<[1], [0], [0], [1], [0, 0, 1, 1], [], []>} : vector<32x32xbf16>, vector<32x32xbf16>, vector<32x32xf32> -> vector<32x32xf32>
    %27 = vector.broadcast %3 : vector<1x32xf32> to vector<32x32xf32>
    %28 = arith.addf %26, %27 : vector<32x32xf32>
    %cst_17 = arith.constant 0.000000e+00 : f32
    %29 = vector.broadcast %cst_17 : f32 to vector<32x32xf32>
    %30 = arith.maximumf %28, %29 : vector<32x32xf32>
    %c0_18 = arith.constant 0 : index
    %c0_19 = arith.constant 0 : index
    %31 = vector.load %arg6[%c0_18, %c0_19] : memref<1x32xf32, #tpu.memory_space<vmem>>, vector<1x32xf32>
    %32 = vector.broadcast %31 : vector<1x32xf32> to vector<32x32xf32>
    %33 = arith.mulf %30, %32 : vector<32x32xf32>
    %cst_20 = arith.constant dense<0.000000e+00> : vector<32xf32>
    %34 = vector.multi_reduction <add>, %33, %cst_20 [1] : vector<32x32xf32> to vector<32xf32>
    %35 = vector.shape_cast %34 : vector<32xf32> to vector<32x1xf32>
    %36 = vector.broadcast %4 : vector<1x1xf32> to vector<32x1xf32>
    %37 = arith.addf %35, %36 : vector<32x1xf32>
    %c0_21 = arith.constant 0 : index
    %c0_22 = arith.constant 0 : index
    %38 = vector.load %arg8[%c0_21, %c0_22] : memref<32x1xf32, #tpu.memory_space<vmem>>, vector<32x1xf32>
    tpu.vector_store %arg8[%c0_21, %c0_22], %37 {strides = array<i32>} : memref<32x1xf32, #tpu.memory_space<vmem>>, vector<32x1xf32>,
    return
  }
  func.func @transform_0(%arg0: i32) -> (i32, i32) {
    %c0_i32 = arith.constant 0 : i32
    %c0_i32_0 = arith.constant 0 : i32
    return %arg0, %c0_i32 : i32, i32
  }
  func.func @transform_1(%arg0: i32) -> (i32, i32) {
    %c0_i32 = arith.constant 0 : i32
    %c0_i32_0 = arith.constant 0 : i32
    return %arg0, %c0_i32 : i32, i32
  }
  func.func @transform_2(%arg0: i32) -> (i32, i32) {
    %c0_i32 = arith.constant 0 : i32
    %c0_i32_0 = arith.constant 0 : i32
    %c0_i32_1 = arith.constant 0 : i32
    return %c0_i32, %c0_i32_0 : i32, i32
  }
  func.func @transform_3(%arg0: i32) -> (i32, i32) {
    %c0_i32 = arith.constant 0 : i32
    %c0_i32_0 = arith.constant 0 : i32
    %c0_i32_1 = arith.constant 0 : i32
    return %c0_i32, %c0_i32_0 : i32, i32
  }
  func.func @transform_4(%arg0: i32) -> (i32, i32) {
    %c0_i32 = arith.constant 0 : i32
    %c0_i32_0 = arith.constant 0 : i32
    %c0_i32_1 = arith.constant 0 : i32
    return %c0_i32, %c0_i32_0 : i32, i32
  }
  func.func @transform_5(%arg0: i32) -> (i32, i32) {
    %c0_i32 = arith.constant 0 : i32
    %c0_i32_0 = arith.constant 0 : i32
    %c0_i32_1 = arith.constant 0 : i32
    return %c0_i32, %c0_i32_0 : i32, i32
  }
  func.func @transform_6(%arg0: i32) -> (i32, i32) {
    %c0_i32 = arith.constant 0 : i32
    %c0_i32_0 = arith.constant 0 : i32
    %c0_i32_1 = arith.constant 0 : i32
    return %c0_i32, %c0_i32_0 : i32, i32
  }
  func.func @transform_7(%arg0: i32) -> (i32, i32) {
    %c0_i32 = arith.constant 0 : i32
    %c0_i32_0 = arith.constant 0 : i32
    return %arg0, %c0_i32 : i32, i32
  }
}

</mosaic_0001>

<llo_original>
// kernel: dite_forward.1
$region0: #{dite_forward.1}
  #allocation0 [shape = 'u32[]', space=smem, size = 0x4, offset = 0x4, fixed_abs, tag = 'smem constant byte address 0x4 - core index']
  #allocation1 [shape = 'u32[144,128]{1,0:T(1,128)}', space=vmem, size = 0x12000, scoped, tag = 'internal scratch']
  %s0 = inlined_call_operand.vmem [shape: bf16[32,16], index: 0, kind: input, shape index: {}]
  %s1 = inlined_call_operand.vmem [shape: bf16[32,2], index: 1, kind: input, shape index: {}]
  %s2 = inlined_call_operand.vmem [shape: bf16[16,32], index: 2, kind: input, shape index: {}]
  %s3 = inlined_call_operand.vmem [shape: f32[2,32], index: 3, kind: input, shape index: {}]
  %s4 = inlined_call_operand.vmem [shape: bf16[32,32], index: 4, kind: input, shape index: {}]
  %s5 = inlined_call_operand.vmem [shape: f32[1,32], index: 5, kind: input, shape index: {}]
  %s6 = inlined_call_operand.vmem [shape: f32[3,32], index: 6, kind: input, shape index: {}]
  %s7 = inlined_call_operand.vmem [shape: f32[32,1], index: 7, kind: output, shape index: {}]
  %s8 = sld [smem:[#allocation0]]
  $region38: #{dite_forward.1} parent=0
    _
  %s10 = ssub.s32 1, %s8
  %s11 = scalar_select 0, %s10, %s8
  // Predicated region
  $region2: #{dite_forward.1} parent=0 // pred_check
    _
  $region3: #{dite_forward.1} parent=0 // pred_check_branch
    %13 = sbr.rel (0) target = $region5
  $region4: #{dite_forward.1} parent=0 // pred_region
    _
  $region5: #{dite_forward.1} parent=0 // pred_fallthru
    _
  // Predicated region
  $region6: #{dite_forward.1} parent=0 // pred_check
    _
  $region7: #{dite_forward.1} parent=0 // pred_check_branch
    %15 = sbr.rel (0) target = $region9
  $region8: #{dite_forward.1} parent=0 // pred_region
    _
  $region9: #{dite_forward.1} parent=0 // pred_fallthru
    _
  // Predicated region
  $region10: #{dite_forward.1} parent=0 // pred_check
    _
  $region11: #{dite_forward.1} parent=0 // pred_check_branch
    %17 = sbr.rel (0) target = $region13
  $region12: #{dite_forward.1} parent=0 // pred_region
    _
  $region13: #{dite_forward.1} parent=0 // pred_fallthru
    _
  // Predicated region
  $region14: #{dite_forward.1} parent=0 // pred_check
    _
  $region15: #{dite_forward.1} parent=0 // pred_check_branch
    %19 = sbr.rel (0) target = $region17
  $region16: #{dite_forward.1} parent=0 // pred_region
    _
  $region17: #{dite_forward.1} parent=0 // pred_fallthru
    _
  // Predicated region
  $region18: #{dite_forward.1} parent=0 // pred_check
    _
  $region19: #{dite_forward.1} parent=0 // pred_check_branch
    %21 = sbr.rel (0) target = $region21
  $region20: #{dite_forward.1} parent=0 // pred_region
    _
  $region21: #{dite_forward.1} parent=0 // pred_fallthru
    _
  // Predicated region
  $region22: #{dite_forward.1} parent=0 // pred_check
    _
  $region23: #{dite_forward.1} parent=0 // pred_check_branch
    %23 = sbr.rel (0) target = $region25
  $region24: #{dite_forward.1} parent=0 // pred_region
    _
  $region25: #{dite_forward.1} parent=0 // pred_fallthru
    _
  // Predicated region
  $region26: #{dite_forward.1} parent=0 // pred_check
    _
  $region27: #{dite_forward.1} parent=0 // pred_check_branch
    %25 = sbr.rel (0) target = $region29
  $region28: #{dite_forward.1} parent=0 // pred_region
    _
  $region29: #{dite_forward.1} parent=0 // pred_fallthru
    _
  %v27 = vld [vmem:[%s1] sm:$0xf]
  %v28 = vld [vmem:[%s1 + $0x4] sm:$0xf]
  %v29 = vld [vmem:[%s1 + $0x8] sm:$0xf]
  %v30 = vld [vmem:[%s1 + $0xc] sm:$0xf]
  %v31 = vunpack.c.l.bf16 %v27
  %v32 = vunpack.c.l.bf16 %v28
  %v33 = vunpack.c.l.bf16 %v29
  %v34 = vunpack.c.l.bf16 %v30
  %v35 = vld [vmem:[%s6] sm:$0x1]
  %v36 = vld [vmem:[%s6 + $0x1] sm:$0x1]
  %v37 = vld [vmem:[%s6 + $0x2] sm:$0x1]
  %v38 = vld [vmem:[%s0] sm:$0xf]
  %v39 = vld [vmem:[%s0 + $0x4] sm:$0xf]
  %v40 = vld [vmem:[%s0 + $0x8] sm:$0xf]
  %v41 = vld [vmem:[%s0 + $0xc] sm:$0xf]
  %v42 = vld [vmem:[%s2] sm:$0xf]
  %v43 = vld [vmem:[%s2 + $0x4] sm:$0xf]
  %v44 = vld [vmem:[%s3] sm:$0x1]
  %46 = vset.pattern.permute.xlu0 0
  %47 = vperm.xlu0 %46, %v31
  %v48 = vpop.permute.xlu0 %47
  %51 = vset.pattern.permute.xlu0 0
  %52 = vperm.xlu0 %51, %v32
  %v53 = vpop.permute.xlu0 %52
  %56 = vset.pattern.permute.xlu0 0
  %57 = vperm.xlu0 %56, %v33
  %v58 = vpop.permute.xlu0 %57
  %61 = vset.pattern.permute.xlu0 0
  %62 = vperm.xlu0 %61, %v34
  %v63 = vpop.permute.xlu0 %62
  %v65 = vlaneseq
  %v66 = vshrl.u32 %v65, 7
  %v67 = vsub.s32 0, %v66
  %v68 = vrot.slane %v44, %v67
  %v69 = vmul.f32 %v48, %v68
  %v70 = vmul.f32 %v53, %v68
  %v71 = vmul.f32 %v58, %v68
  %v72 = vmul.f32 %v63, %v68
  %v77 = vunpack.c.l.b16 %v38
  %v78 = vunpack.c.l.b16 %v39
  %v79 = vunpack.c.l.b16 %v40
  %v80 = vunpack.c.l.b16 %v41
  %v81 = vpack.c.b16 %v78, %v77
  %v82 = vpack.c.b16 %v80, %v79
  %v85 = vunpack.c.l.b16 %v42
  %v86 = vunpack.c.l.b16 %v43
  %v87 = vpack.c.b16 %v86, %v85
  %vm89 = vcmask 130048
  %v91 = vsel %vm89, %v81, 0
  %v94 = vsel %vm89, %v82, 0
  %96 = vmatprep.subr.bf16.mxu0 0
  %97 = vmatpush1.bf16.msra.mxu0 %v87
  %98 = vmatprep.subr.bf16.mxu0 0
  %99 = vmatpush1.bf16.msra.mxu0 0
  %100 = vmatprep.subr.bf16.mxu0 0
  %101 = vmatpush1.bf16.msra.mxu0 0
  %102 = vmatprep.subr.bf16.mxu0 0
  %103 = vmatpush1.bf16.msra.mxu0 0
  %104 = vmatprep.subr.bf16.mxu0 0
  %105 = vmatpush1.bf16.msra.mxu0 0
  %106 = vmatprep.subr.bf16.mxu0 0
  %107 = vmatpush1.bf16.msra.mxu0 0
  %108 = vmatprep.subr.bf16.mxu0 0
  %109 = vmatpush1.bf16.msra.mxu0 0
  %110 = vmatprep.subr.bf16.mxu0 0
  %111 = vmatpush1.bf16.msra.mxu0 0
  %112 = vmatprep.subr.bf16.mxu0 0
  %113 = vmatpush1.bf16.msra.mxu0 0
  %114 = vmatprep.subr.bf16.mxu0 0
  %115 = vmatpush1.bf16.msra.mxu0 0
  %116 = vmatprep.subr.bf16.mxu0 0
  %117 = vmatpush1.bf16.msra.mxu0 0
  %118 = vmatprep.subr.bf16.mxu0 0
  %119 = vmatpush1.bf16.msra.mxu0 0
  %120 = vmatprep.subr.bf16.mxu0 0
  %121 = vmatpush1.bf16.msra.mxu0 0
  %122 = vmatprep.subr.bf16.mxu0 0
  %123 = vmatpush1.bf16.msra.mxu0 0
  %124 = vmatprep.subr.bf16.mxu0 0
  %125 = vmatpush1.bf16.msra.mxu0 0
  %126 = vmatprep.subr.bf16.mxu0 0
  %127 = vmatpush1.bf16.msra.mxu0 0
  %128 = vmatprep.mubr.bf16.mxu0 0
  %129 = vmatmul.mubr.bf16.gmra.mrb[0].mxu0 %v91
  %v130 = vpop.f32.mrb[0].mxu0
  %v131 = vadd.f32 %v69, %v130
  %v132 = vpop.f32.mrb[0].mxu0
  %v133 = vpop.f32.mrb[0].mxu0
  %v134 = vadd.f32 %v70, %v133
  %v135 = vpop.f32.mrb[0].mxu0
  %136 = vmatprep.mubr.bf16.mxu0 0
  %137 = vmatmul.mubr.bf16.gmra.mrb[0].mxu0 %v94
  %v138 = vpop.f32.mrb[0].mxu0
  %v139 = vadd.f32 %v71, %v138
  %v140 = vpop.f32.mrb[0].mxu0
  %v141 = vpop.f32.mrb[0].mxu0
  %v142 = vadd.f32 %v72, %v141
  %v143 = vpop.f32.mrb[0].mxu0
  %144 = vdwg.mxu0
  %v145 = vld [vmem:[%s3 + $0x1] sm:$0x1]
  %146 = vset.pattern.permute.xlu0 1
  %147 = vperm.xlu0 %146, %v31
  %v148 = vpop.permute.xlu0 %147
  %150 = vset.pattern.permute.xlu0 1
  %151 = vperm.xlu0 %150, %v32
  %v152 = vpop.permute.xlu0 %151
  %154 = vset.pattern.permute.xlu0 1
  %155 = vperm.xlu0 %154, %v33
  %v156 = vpop.permute.xlu0 %155
  %158 = vset.pattern.permute.xlu0 1
  %159 = vperm.xlu0 %158, %v34
  %v160 = vpop.permute.xlu0 %159
  %v162 = vlaneseq
  %v163 = vshrl.u32 %v162, 7
  %v164 = vsub.s32 0, %v163
  %v165 = vrot.slane %v145, %v164
  %v166 = vmul.f32 %v148, %v165
  %v167 = vmul.f32 %v152, %v165
  %v168 = vmul.f32 %v156, %v165
  %v169 = vmul.f32 %v160, %v165
  %v170 = vadd.f32 %v131, %v166
  %v171 = vadd.f32 %v134, %v167
  %v172 = vadd.f32 %v139, %v168
  %v173 = vadd.f32 %v142, %v169
  %v174 = vlaneseq
  %v175 = vshrl.u32 %v174, 7
  %v176 = vsub.s32 0, %v175
  %v177 = vrot.slane %v35, %v176
  %v178 = vadd.f32 %v170, %v177
  %v179 = vadd.f32 %v171, %v177
  %v180 = vadd.f32 %v172, %v177
  %v181 = vadd.f32 %v173, %v177
  %v182 = vmax.f32 %v178, 0.0
  %v183 = vmax.f32 %v179, 0.0
  %v184 = vmax.f32 %v180, 0.0
  %v185 = vmax.f32 %v181, 0.0
  %v186 = vpack.c.bf16 %v183, %v182
  %v187 = vpack.c.bf16 %v185, %v184
  %v188 = vld [vmem:[%s4] sm:$0xf]
  %v189 = vld [vmem:[%s4 + $0x4] sm:$0xf]
  %v190 = vld [vmem:[%s4 + $0x8] sm:$0xf]
  %v191 = vld [vmem:[%s4 + $0xc] sm:$0xf]
  %v192 = vlaneseq
  %v193 = vshrl.u32 %v192, 7
  %v194 = vsub.s32 0, %v193
  %v195 = vrot.slane %v36, %v194
  %v200 = vunpack.c.l.b16 %v188
  %v201 = vunpack.c.l.b16 %v189
  %v202 = vunpack.c.l.b16 %v190
  %v203 = vunpack.c.l.b16 %v191
  %v204 = vpack.c.b16 %v201, %v200
  %v205 = vpack.c.b16 %v203, %v202
  %vm208 = vcmask 261120
  %v210 = vsel %vm208, %v186, 0
  %v213 = vsel %vm208, %v187, 0
  %215 = vmatprep.subr.bf16.mxu0 0
  %216 = vmatpush1.bf16.msra.mxu0 %v204
  %217 = vmatprep.subr.bf16.mxu0 0
  %218 = vmatpush1.bf16.msra.mxu0 %v205
  %219 = vmatprep.subr.bf16.mxu0 0
  %220 = vmatpush1.bf16.msra.mxu0 0
  %221 = vmatprep.subr.bf16.mxu0 0
  %222 = vmatpush1.bf16.msra.mxu0 0
  %223 = vmatprep.subr.bf16.mxu0 0
  %224 = vmatpush1.bf16.msra.mxu0 0
  %225 = vmatprep.subr.bf16.mxu0 0
  %226 = vmatpush1.bf16.msra.mxu0 0
  %227 = vmatprep.subr.bf16.mxu0 0
  %228 = vmatpush1.bf16.msra.mxu0 0
  %229 = vmatprep.subr.bf16.mxu0 0
  %230 = vmatpush1.bf16.msra.mxu0 0
  %231 = vmatprep.subr.bf16.mxu0 0
  %232 = vmatpush1.bf16.msra.mxu0 0
  %233 = vmatprep.subr.bf16.mxu0 0
  %234 = vmatpush1.bf16.msra.mxu0 0
  %235 = vmatprep.subr.bf16.mxu0 0
  %236 = vmatpush1.bf16.msra.mxu0 0
  %237 = vmatprep.subr.bf16.mxu0 0
  %238 = vmatpush1.bf16.msra.mxu0 0
  %239 = vmatprep.subr.bf16.mxu0 0
  %240 = vmatpush1.bf16.msra.mxu0 0
  %241 = vmatprep.subr.bf16.mxu0 0
  %242 = vmatpush1.bf16.msra.mxu0 0
  %243 = vmatprep.subr.bf16.mxu0 0
  %244 = vmatpush1.bf16.msra.mxu0 0
  %245 = vmatprep.subr.bf16.mxu0 0
  %246 = vmatpush1.bf16.msra.mxu0 0
  %247 = vmatprep.mubr.bf16.mxu0 0
  %248 = vmatmul.mubr.bf16.gmra.mrb[0].mxu0 %v210
  %v249 = vpop.f32.mrb[0].mxu0
  %v250 = vadd.f32 %v195, %v249
  %v251 = vpop.f32.mrb[0].mxu0
  %v252 = vpop.f32.mrb[0].mxu0
  %v253 = vadd.f32 %v195, %v252
  %v254 = vpop.f32.mrb[0].mxu0
  %255 = vmatprep.mubr.bf16.mxu0 0
  %256 = vmatmul.mubr.bf16.gmra.mrb[0].mxu0 %v213
  %v257 = vpop.f32.mrb[0].mxu0
  %v258 = vadd.f32 %v195, %v257
  %v259 = vpop.f32.mrb[0].mxu0
  %v260 = vpop.f32.mrb[0].mxu0
  %v261 = vadd.f32 %v195, %v260
  %v262 = vpop.f32.mrb[0].mxu0
  %263 = vdwg.mxu0
  %v264 = vmax.f32 %v250, 0.0
  %v265 = vmax.f32 %v253, 0.0
  %v266 = vmax.f32 %v258, 0.0
  %v267 = vmax.f32 %v261, 0.0
  %v268 = vld [vmem:[%s5] sm:$0x1]
  %v270 = vlaneseq
  %v271 = vshrl.u32 %v270, 7
  %v272 = vsub.s32 0, %v271
  %v273 = vrot.slane %v268, %v272
  %v275 = vmul.f32 %v264, %v273
  %v276 = vmul.f32 %v265, %v273
  %v277 = vmul.f32 %v266, %v273
  %v278 = vmul.f32 %v267, %v273
  %v279 = vsel %vm208, %v275, 0.0
  %280 = vadd.xlane.f32.xlu0 %v279
  %v281 = vpop.xlane.xlu0 %280
  %v282 = vsel %vm208, %v276, 0.0
  %283 = vadd.xlane.f32.xlu0 %v282
  %v284 = vpop.xlane.xlu0 %283
  %v285 = vsel %vm208, %v277, 0.0
  %286 = vadd.xlane.f32.xlu0 %v285
  %v287 = vpop.xlane.xlu0 %286
  %v288 = vsel %vm208, %v278, 0.0
  %289 = vadd.xlane.f32.xlu0 %v288
  %v290 = vpop.xlane.xlu0 %289
  %v291 = vlaneseq
  %v292 = vshrl.u32 %v291, 7
  %v293 = vsub.s32 0, %v292
  %v294 = vrot.slane %v37, %v293
  %v295 = vadd.f32 %v281, %v294
  %v296 = vadd.f32 %v284, %v294
  %v297 = vadd.f32 %v287, %v294
  %v298 = vadd.f32 %v290, %v294
  %vm299 = vcmask 7168
  %300 = vst.msk [vmem:[%s7] sm:$0xff] %vm299, %v295
  %301 = vst.msk [vmem:[%s7 + $0x8] sm:$0xff] %vm299, %v296
  %302 = vst.msk [vmem:[%s7 + $0x10] sm:$0xff] %vm299, %v297
  %303 = vst.msk [vmem:[%s7 + $0x18] sm:$0xff] %vm299, %v298
  // Predicated region
  $region30: #{dite_forward.1} parent=0 // pred_check
    _
  $region31: #{dite_forward.1} parent=0 // pred_check_branch
    %305 = sbr.rel (0) target = $region33
  $region32: #{dite_forward.1} parent=0 // pred_region
    _
  $region33: #{dite_forward.1} parent=0 // pred_fallthru
    _
  // Predicated region
  $region34: #{dite_forward.1} parent=0 // pred_check
    _
  $region35: #{dite_forward.1} parent=0 // pred_check_branch
    %307 = sbr.rel (0) target = $region37
  $region36: #{dite_forward.1} parent=0 // pred_region
    _
  $region37: #{dite_forward.1} parent=0 // pred_fallthru
    _

</llo_original>
